<compile_context>
chip_gen: v7x
topology: tpu7x:2x2x1
jax: 0.10.0
libtpu: 0.0.40
codegen_flags: <defaults>
</compile_context>

<pallas_src>
import functools

import jax
import jax.numpy as jnp
from jax import lax
from jax.experimental import pallas as pl
from jax.experimental.pallas import tpu as pltpu


def _spectral_loss_kernel(filt_ref, inp_ref, tgt_ref, mask_ref, out_ref,
                          acc_ref, sq_ref, cnt_ref, *, use_bf16):
    i = pl.program_id(0)
    k = pl.program_id(1)
    nk = pl.num_programs(1)

    @pl.when(k == 0)
    def _init():
        acc_ref[...] = jnp.zeros_like(acc_ref)
        sq_ref[...] = jnp.zeros_like(sq_ref)
        cnt_ref[...] = jnp.zeros_like(cnt_ref)

    inp = inp_ref[...]                                    # (tk, D) f32
    filt = filt_ref[...]                                  # (tm, tk) f32
    if use_bf16:
        # bf16 x bf16 -> f32 is ~3x MXU throughput; acceptable for a Frobenius-
        # norm regularizer when exact f32 is not required.
        filt = filt.astype(jnp.bfloat16)
        rhs = inp.astype(jnp.bfloat16)
    else:
        rhs = inp
    acc_ref[...] += jnp.dot(filt, rhs, preferred_element_type=jnp.float32)

    # Masked-MSE partials: each (tk, D) tile of inp/target/mask contributes
    # exactly once (only on the first row-tile).
    @pl.when(i == 0)
    def _mse():
        sel = mask_ref[...] != 0                          # int8 -> bool, in-kernel
        diff = inp - tgt_ref[...]
        sq_ref[...] += jnp.sum(jnp.where(sel, diff * diff, 0.0))
        cnt_ref[...] += jnp.sum(sel.astype(jnp.int32))    # exact integer count

    @pl.when(k == nk - 1)
    def _finalize():
        fx = acc_ref[...]                                 # (tm, D) = rows of filter @ inp
        reg = jnp.sum(fx * fx)                            # per-i-tile partial
        lane = lax.broadcasted_iota(jnp.int32, out_ref.shape, 2)
        sqv = sq_ref[...].reshape(1, 1, 1)
        cntv = cnt_ref[...].astype(jnp.float32).reshape(1, 1, 1)
        row = jnp.where(lane == 0, reg, 0.0)              # lane 0: reg partial
        row = jnp.where(lane == 1, sqv, row)              # lane 1: sum(mask*diff^2)
        row = jnp.where(lane == 2, cntv, row)             # lane 2: sum(mask)
        out_ref[...] = row                                # full (1, 8, 128) store


def _pick_tile(n, candidates):
    for c in candidates:
        if n % c == 0:
            return c
    return n  # full extent is always a legal block


def spectral_loss(inp, target, mask, filt, gamma, *, tm=None, tk=None,
                  use_bf16=False):
    """inp/target: (N, D) f32, mask: (N, D) bool, filt: (N, N) f32."""
    N, D = inp.shape
    assert filt.shape == (N, N)
    # tk is the lane (last) dim of the filter block -> multiple of 128 or full N;
    # tm only needs to be sublane friendly.
    tm = _pick_tile(N, (256, 128, 64, 32, 16, 8)) if tm is None else tm
    tk = _pick_tile(N, (256, 128)) if tk is None else tk
    assert N % tm == 0 and N % tk == 0, (N, tm, tk)
    ni, nk = N // tm, N // tk

    mask_i8 = mask.astype(jnp.int8)   # 1 byte/elem over HBM; f32-ification is in-kernel

    kernel = functools.partial(_spectral_loss_kernel, use_bf16=use_bf16)
    partials = pl.pallas_call(
        kernel,
        out_shape=jax.ShapeDtypeStruct((ni, 8, 128), jnp.float32),
        grid_spec=pltpu.PrefetchScalarGridSpec(
            num_scalar_prefetch=0,
            grid=(ni, nk),                                    # reduction axis last
            in_specs=[
                pl.BlockSpec((tm, tk), lambda i, k: (i, k)),  # filter tile
                pl.BlockSpec((tk, D), lambda i, k: (k, 0)),   # inp tile
                pl.BlockSpec((tk, D), lambda i, k: (k, 0)),   # target tile
                pl.BlockSpec((tk, D), lambda i, k: (k, 0)),   # mask tile (int8)
            ],
            out_specs=pl.BlockSpec((1, 8, 128), lambda i, k: (i, 0, 0)),
            scratch_shapes=[
                pltpu.VMEM((tm, D), jnp.float32),   # filter@inp row-tile accumulator
                pltpu.VMEM((1, 1), jnp.float32),    # sum(mask * diff^2)
                pltpu.VMEM((1, 1), jnp.int32),      # sum(mask), exact
            ],
        ),
        compiler_params=pltpu.CompilerParams(
            # i tiles are independent -> megacore-shardable on v7x;
            # k is the contraction / accumulation axis.
            dimension_semantics=("parallel", "arbitrary"),
        ),
    )(filt, inp, target, mask_i8)

    reg = jnp.sum(partials[:, 0, 0])      # sum of per-i-tile ||filter@inp||^2 partials
    sq = jnp.sum(partials[:, 0, 1])       # only the i==0 row is non-zero
    cnt = jnp.sum(partials[:, 0, 2])
    mse = sq / cnt                        # NaN if mask empty (matches torch)
    # gamma applied on the host side: no Mosaic recompile when gamma changes.
    return mse + gamma * reg


def _reference(inp, target, mask, filt, gamma):
    diff = jnp.where(mask, inp - target, 0.0)
    mse = jnp.sum(diff * diff) / jnp.sum(mask.astype(jnp.float32))
    fx = jnp.dot(filt, inp, precision=lax.Precision.HIGHEST)
    return mse + gamma * jnp.sum(fx * fx)


if __name__ == "__main__":
    N, D = 256, 128          # 256 graph nodes, 128 features (small but tileable)
    gamma = 0.5

    key = jax.random.PRNGKey(0)
    k_inp, k_tgt, k_mask, k_filt = jax.random.split(key, 4)

    inp = jax.random.normal(k_inp, (N, D), dtype=jnp.float32)
    target = jax.random.normal(k_tgt, (N, D), dtype=jnp.float32)
    mask = jax.random.bernoulli(k_mask, 0.7, (N, D))
    # Deterministic synthetic "filter" (e.g. graph-Laplacian-like matrix).
    filt = 0.05 * jax.random.normal(k_filt, (N, N), dtype=jnp.float32)

    # tm=tk=128 -> grid (2, 2): exercises both the k accumulation and the
    # per-i-tile parallel partial outputs.
    loss = spectral_loss(inp, target, mask, filt, gamma, tm=128, tk=128)
    jax.block_until_ready(loss)

    ref = _reference(inp, target, mask, filt, gamma)
    assert jnp.allclose(loss, ref, rtol=1e-4, atol=1e-4), (loss, ref)

    print("KERNEL_OK")
</pallas_src>

<mosaic_0001>
module attributes {stable_mosaic.version = 11 : i64} {
  func.func @_spectral_loss_kernel(%arg0: i32, %arg1: i32, %arg2: memref<128x128xf32, #tpu.memory_space<vmem>>, %arg3: memref<128x128xf32, #tpu.memory_space<vmem>>, %arg4: memref<128x128xf32, #tpu.memory_space<vmem>>, %arg5: memref<128x128xi8, #tpu.memory_space<vmem>>, %arg6: memref<1x8x128xf32, #tpu.memory_space<vmem>>, %arg7: memref<128x128xf32, #tpu.memory_space<vmem>>, %arg8: memref<1x1xf32, #tpu.memory_space<vmem>>, %arg9: memref<1x1xi32, #tpu.memory_space<vmem>>) attributes {dimension_semantics = [#tpu.dimension_semantics<parallel>, #tpu.dimension_semantics<arbitrary>], iteration_bounds = array<i64: 2, 2>, scalar_prefetch = 0 : i64, scratch_operands = 3 : i64, tpu.core_type = #tpu.core_type<tc>, window_params = [{transform_indices = @transform_0, window_bounds = array<i64: 128, 128>}, {transform_indices = @transform_1, window_bounds = array<i64: 128, 128>}, {transform_indices = @transform_2, window_bounds = array<i64: 128, 128>}, {transform_indices = @transform_3, window_bounds = array<i64: 128, 128>}, {transform_indices = @transform_4, window_bounds = array<i64: 1, 8, 128>}]} {
    %c0_i32 = arith.constant 0 : i32
    %0 = arith.cmpi eq, %arg1, %c0_i32 : i32
    %1 = arith.extui %0 : i1 to i32
    %c0_i32_0 = arith.constant 0 : i32
    %2 = arith.cmpi ne, %1, %c0_i32_0 : i32
    scf.if %2 {
      %cst_11 = arith.constant 0.000000e+00 : f32
      %15 = vector.broadcast %cst_11 : f32 to vector<128x128xf32>
      %c0_12 = arith.constant 0 : index
      %c0_13 = arith.constant 0 : index
      %16 = vector.load %arg7[%c0_12, %c0_13] : memref<128x128xf32, #tpu.memory_space<vmem>>, vector<128x128xf32>
      tpu.vector_store %arg7[%c0_12, %c0_13], %15 {strides = array<i32>} : memref<128x128xf32, #tpu.memory_space<vmem>>, vector<128x128xf32>,
      %cst_14 = arith.constant 0.000000e+00 : f32
      %17 = vector.broadcast %cst_14 : f32 to vector<1x1xf32>
      %c0_15 = arith.constant 0 : index
      %c0_16 = arith.constant 0 : index
      %18 = vector.load %arg8[%c0_15, %c0_16] : memref<1x1xf32, #tpu.memory_space<vmem>>, vector<1x1xf32>
      tpu.vector_store %arg8[%c0_15, %c0_16], %17 {strides = array<i32>} : memref<1x1xf32, #tpu.memory_space<vmem>>, vector<1x1xf32>,
      %c0_i32_17 = arith.constant 0 : i32
      %19 = vector.broadcast %c0_i32_17 : i32 to vector<1x1xi32>
      %c0_18 = arith.constant 0 : index
      %c0_19 = arith.constant 0 : index
      %20 = vector.load %arg9[%c0_18, %c0_19] : memref<1x1xi32, #tpu.memory_space<vmem>>, vector<1x1xi32>
      tpu.vector_store %arg9[%c0_18, %c0_19], %19 {strides = array<i32>} : memref<1x1xi32, #tpu.memory_space<vmem>>, vector<1x1xi32>,
    } else {
    }
    %c0 = arith.constant 0 : index
    %c0_1 = arith.constant 0 : index
    %3 = vector.load %arg3[%c0, %c0_1] : memref<128x128xf32, #tpu.memory_space<vmem>>, vector<128x128xf32>
    %c0_2 = arith.constant 0 : index
    %c0_3 = arith.constant 0 : index
    %4 = vector.load %arg2[%c0_2, %c0_3] : memref<128x128xf32, #tpu.memory_space<vmem>>, vector<128x128xf32>
    %c0_4 = arith.constant 0 : index
    %c0_5 = arith.constant 0 : index
    %5 = vector.load %arg7[%c0_4, %c0_5] : memref<128x128xf32, #tpu.memory_space<vmem>>, vector<128x128xf32>
    %cst = arith.constant dense<0.000000e+00> : vector<128x128xf32>
    %6 = tpu.matmul %4, %3, %cst {dimension_numbers = #tpu.dot_dimension_numbers<[1], [0], [0], [1], [0, 0, 1, 1], [], []>} : vector<128x128xf32>, vector<128x128xf32>, vector<128x128xf32> -> vector<128x128xf32>
    %7 = arith.addf %5, %6 : vector<128x128xf32>
    %c0_6 = arith.constant 0 : index
    %c0_7 = arith.constant 0 : index
    %8 = vector.load %arg7[%c0_6, %c0_7] : memref<128x128xf32, #tpu.memory_space<vmem>>, vector<128x128xf32>
    tpu.vector_store %arg7[%c0_6, %c0_7], %7 {strides = array<i32>} : memref<128x128xf32, #tpu.memory_space<vmem>>, vector<128x128xf32>,
    %c0_i32_8 = arith.constant 0 : i32
    %9 = arith.cmpi eq, %arg0, %c0_i32_8 : i32
    %10 = arith.extui %9 : i1 to i32
    %c0_i32_9 = arith.constant 0 : i32
    %11 = arith.cmpi ne, %10, %c0_i32_9 : i32
    scf.if %11 {
      %c0_11 = arith.constant 0 : index
      %c0_12 = arith.constant 0 : index
      %15 = vector.load %arg5[%c0_11, %c0_12] : memref<128x128xi8, #tpu.memory_space<vmem>>, vector<128x128xi8>
      %c0_i8 = arith.constant 0 : i8
      %16 = vector.broadcast %c0_i8 : i8 to vector<128x128xi8>
      %17 = arith.cmpi ne, %15, %16 : vector<128x128xi8>
      %c0_13 = arith.constant 0 : index
      %c0_14 = arith.constant 0 : index
      %18 = vector.load %arg4[%c0_13, %c0_14] : memref<128x128xf32, #tpu.memory_space<vmem>>, vector<128x128xf32>
      %19 = arith.subf %3, %18 : vector<128x128xf32>
      %c0_15 = arith.constant 0 : index
      %c0_16 = arith.constant 0 : index
      %20 = vector.load %arg8[%c0_15, %c0_16] : memref<1x1xf32, #tpu.memory_space<vmem>>, vector<1x1xf32>
      %21 = arith.mulf %19, %19 : vector<128x128xf32>
      %cst_17 = arith.constant 0.000000e+00 : f32
      %22 = vector.broadcast %cst_17 : f32 to vector<128x128xf32>
      %23 = arith.select %17, %21, %22 : vector<128x128xi1>, vector<128x128xf32>
      %24 = vector.shape_cast %23 : vector<128x128xf32> to vector<1x128x128xf32>
      %cst_18 = arith.constant dense<0.000000e+00> : vector<1xf32>
      %25 = vector.multi_reduction <add>, %24, %cst_18 [1, 2] : vector<1x128x128xf32> to vector<1xf32>
      %26 = vector.shape_cast %25 : vector<1xf32> to vector<1x1x1xf32>
      %27 = vector.extract %26[0, 0, 0] : f32 from vector<1x1x1xf32>
      %28 = vector.broadcast %27 : f32 to vector<1x1xf32>
      %29 = arith.addf %20, %28 : vector<1x1xf32>
      %c0_19 = arith.constant 0 : index
      %c0_20 = arith.constant 0 : index
      %30 = vector.load %arg8[%c0_19, %c0_20] : memref<1x1xf32, #tpu.memory_space<vmem>>, vector<1x1xf32>
      tpu.vector_store %arg8[%c0_19, %c0_20], %29 {strides = array<i32>} : memref<1x1xf32, #tpu.memory_space<vmem>>, vector<1x1xf32>,
      %c0_21 = arith.constant 0 : index
      %c0_22 = arith.constant 0 : index
      %31 = vector.load %arg9[%c0_21, %c0_22] : memref<1x1xi32, #tpu.memory_space<vmem>>, vector<1x1xi32>
      %32 = arith.extui %17 : vector<128x128xi1> to vector<128x128xi32>
      %33 = vector.shape_cast %32 : vector<128x128xi32> to vector<1x128x128xi32>
      %cst_23 = arith.constant dense<0> : vector<1xi32>
      %34 = vector.multi_reduction <add>, %33, %cst_23 [1, 2] : vector<1x128x128xi32> to vector<1xi32>
      %35 = vector.shape_cast %34 : vector<1xi32> to vector<1x1x1xi32>
      %36 = vector.extract %35[0, 0, 0] : i32 from vector<1x1x1xi32>
      %37 = vector.broadcast %36 : i32 to vector<1x1xi32>
      %38 = arith.addi %31, %37 : vector<1x1xi32>
      %c0_24 = arith.constant 0 : index
      %c0_25 = arith.constant 0 : index
      %39 = vector.load %arg9[%c0_24, %c0_25] : memref<1x1xi32, #tpu.memory_space<vmem>>, vector<1x1xi32>
      tpu.vector_store %arg9[%c0_24, %c0_25], %38 {strides = array<i32>} : memref<1x1xi32, #tpu.memory_space<vmem>>, vector<1x1xi32>,
    } else {
    }
    %c1_i32 = arith.constant 1 : i32
    %12 = arith.cmpi eq, %arg1, %c1_i32 : i32
    %13 = arith.extui %12 : i1 to i32
    %c0_i32_10 = arith.constant 0 : i32
    %14 = arith.cmpi ne, %13, %c0_i32_10 : i32
    scf.if %14 {
      %c0_11 = arith.constant 0 : index
      %c0_12 = arith.constant 0 : index
      %15 = vector.load %arg7[%c0_11, %c0_12] : memref<128x128xf32, #tpu.memory_space<vmem>>, vector<128x128xf32>
      %16 = arith.mulf %15, %15 : vector<128x128xf32>
      %17 = vector.shape_cast %16 : vector<128x128xf32> to vector<1x128x128xf32>
      %cst_13 = arith.constant dense<0.000000e+00> : vector<1xf32>
      %18 = vector.multi_reduction <add>, %17, %cst_13 [1, 2] : vector<1x128x128xf32> to vector<1xf32>
      %19 = vector.shape_cast %18 : vector<1xf32> to vector<1x1x1xf32>
      %20 = vector.extract %19[0, 0, 0] : f32 from vector<1x1x1xf32>
      %21 = tpu.iota {dimensions = array<i32: 2>} : vector<1x8x128xi32>
      %c0_14 = arith.constant 0 : index
      %c0_15 = arith.constant 0 : index
      %22 = vector.load %arg8[%c0_14, %c0_15] : memref<1x1xf32, #tpu.memory_space<vmem>>, vector<1x1xf32>
      %23 = vector.shape_cast %22 : vector<1x1xf32> to vector<1x1x1xf32>
      %c0_16 = arith.constant 0 : index
      %c0_17 = arith.constant 0 : index
      %24 = vector.load %arg9[%c0_16, %c0_17] : memref<1x1xi32, #tpu.memory_space<vmem>>, vector<1x1xi32>
      %25 = arith.sitofp %24 : vector<1x1xi32> to vector<1x1xf32>
      %26 = vector.shape_cast %25 : vector<1x1xf32> to vector<1x1x1xf32>
      %c0_i32_18 = arith.constant 0 : i32
      %27 = vector.broadcast %c0_i32_18 : i32 to vector<1x8x128xi32>
      %28 = arith.cmpi eq, %21, %27 : vector<1x8x128xi32>
      %cst_19 = arith.constant 0.000000e+00 : f32
      %29 = vector.broadcast %20 : f32 to vector<1x8x128xf32>
      %30 = vector.broadcast %cst_19 : f32 to vector<1x8x128xf32>
      %31 = arith.select %28, %29, %30 : vector<1x8x128xi1>, vector<1x8x128xf32>
      %c1_i32_20 = arith.constant 1 : i32
      %32 = vector.broadcast %c1_i32_20 : i32 to vector<1x8x128xi32>
      %33 = arith.cmpi eq, %21, %32 : vector<1x8x128xi32>
      %34 = vector.shape_cast %23 : vector<1x1x1xf32> to vector<1x1x1xf32>
      %35 = vector.broadcast %34 : vector<1x1x1xf32> to vector<1x8x128xf32>
      %36 = arith.select %33, %35, %31 : vector<1x8x128xi1>, vector<1x8x128xf32>
      %c2_i32 = arith.constant 2 : i32
      %37 = vector.broadcast %c2_i32 : i32 to vector<1x8x128xi32>
      %38 = arith.cmpi eq, %21, %37 : vector<1x8x128xi32>
      %39 = vector.shape_cast %26 : vector<1x1x1xf32> to vector<1x1x1xf32>
      %40 = vector.broadcast %39 : vector<1x1x1xf32> to vector<1x8x128xf32>
      %41 = arith.select %38, %40, %36 : vector<1x8x128xi1>, vector<1x8x128xf32>
      %c0_21 = arith.constant 0 : index
      %c0_22 = arith.constant 0 : index
      %c0_23 = arith.constant 0 : index
      %42 = vector.load %arg6[%c0_21, %c0_22, %c0_23] : memref<1x8x128xf32, #tpu.memory_space<vmem>>, vector<1x8x128xf32>
      tpu.vector_store %arg6[%c0_21, %c0_22, %c0_23], %41 {strides = array<i32>} : memref<1x8x128xf32, #tpu.memory_space<vmem>>, vector<1x8x128xf32>,
    } else {
    }
    return
  }
  func.func @transform_0(%arg0: i32, %arg1: i32) -> (i32, i32) {
    %c0_i32 = arith.constant 0 : i32
    return %arg0, %arg1 : i32, i32
  }
  func.func @transform_1(%arg0: i32, %arg1: i32) -> (i32, i32) {
    %c0_i32 = arith.constant 0 : i32
    %c0_i32_0 = arith.constant 0 : i32
    return %arg1, %c0_i32 : i32, i32
  }
  func.func @transform_2(%arg0: i32, %arg1: i32) -> (i32, i32) {
    %c0_i32 = arith.constant 0 : i32
    %c0_i32_0 = arith.constant 0 : i32
    return %arg1, %c0_i32 : i32, i32
  }
  func.func @transform_3(%arg0: i32, %arg1: i32) -> (i32, i32) {
    %c0_i32 = arith.constant 0 : i32
    %c0_i32_0 = arith.constant 0 : i32
    return %arg1, %c0_i32 : i32, i32
  }
  func.func @transform_4(%arg0: i32, %arg1: i32) -> (i32, i32, i32) {
    %c0_i32 = arith.constant 0 : i32
    %c0_i32_0 = arith.constant 0 : i32
    %c0_i32_1 = arith.constant 0 : i32
    return %arg0, %c0_i32, %c0_i32_0 : i32, i32, i32
  }
}

</mosaic_0001>

<llo_original>
// kernel: tpu_custom_call.1
$region0: #{tpu_custom_call.1}
  #allocation0 [shape = 'u32[]', space=smem, size = 0x4, offset = 0x4, fixed_abs, tag = 'smem constant byte address 0x4 - core index']
  #allocation1 [shape = 'u32[144,128]{1,0:T(1,128)}', space=vmem, size = 0x12000, scoped, tag = 'internal scratch']
  #allocation2 [shape = 'f32[128,128]{1,0:T(8,128)}', space=vmem, size = 0x10000, scoped, tag = 'scratch operand']
  #allocation3 [shape = 'f32[1,1]{1,0:T(1,128)}', space=vmem, size = 0x200, scoped, tag = 'scratch operand']
  #allocation4 [shape = 's32[1,1]{1,0:T(1,128)}', space=vmem, size = 0x200, scoped, tag = 'scratch operand']
  %s0 = inlined_call_operand.hbm [shape: f32[256,256], index: 0, kind: input, shape index: {}]
  %s1 = inlined_call_operand.hbm [shape: f32[256,128], index: 1, kind: input, shape index: {}]
  %s2 = inlined_call_operand.hbm [shape: f32[256,128], index: 2, kind: input, shape index: {}]
  %s3 = inlined_call_operand.hbm [shape: s8[256,128], index: 3, kind: input, shape index: {}]
  %s4 = inlined_call_operand.hbm [shape: f32[2,8,128], index: 4, kind: output, shape index: {}]
  %s5 = sld [smem:[#allocation0]]
  $region77: #{tpu_custom_call.1} parent=0
    _
  %s7 = ssub.s32 1, %s5
  %s8 = scalar_select 0, %s7, %s5
  $region1: #{tpu_custom_call.1} parent=0
    #allocation5 [shape = 'u8[131072]{0}', space=vmem, size = 0x20000, scoped, tag = 'input window, operand 0']
    #allocation6 [shape = 's32[2]{0}', space=sflag, size = 0x8, scoped, tag = 'scoped memory for tpu_custom_call.1']
    #allocation7 [shape = 's32[2]{0}', space=sflag, size = 0x8, scoped, tag = 'scoped memory for tpu_custom_call.1']
    #allocation8 [shape = 'u8[131072]{0}', space=vmem, size = 0x20000, scoped, tag = 'input window, operand 1']
    #allocation9 [shape = 's32[2]{0}', space=sflag, size = 0x8, scoped, tag = 'scoped memory for tpu_custom_call.1']
    #allocation10 [shape = 'u8[131072]{0}', space=vmem, size = 0x20000, scoped, tag = 'input window, operand 2']
    #allocation11 [shape = 'u8[32768]{0}', space=vmem, size = 0x8000, scoped, tag = 'input window, operand 3']
    #allocation12 [shape = 's32[2]{0}', space=sflag, size = 0x8, scoped, tag = 'scoped memory for tpu_custom_call.1']
    #allocation13 [shape = 'u8[8192]{0}', space=vmem, size = 0x2000, scoped, tag = 'output window, operand 0']
    %9 = vsyncpa [#allocation6], 0
    %s10 = scalar_lea.sflag [#allocation6], 1
    %11 = vsyncpa %s10, 0
    %12 = vsyncpa [#allocation9], 0
    %s13 = scalar_lea.sflag [#allocation9], 1
    %14 = vsyncpa %s13, 0
    %15 = vsyncpa [#allocation12], 0
    %s16 = scalar_lea.sflag [#allocation12], 1
    %17 = vsyncpa %s16, 0
    %18 = vsyncpa [#allocation7], 0
    %s19 = scalar_lea.sflag [#allocation7], 1
    %20 = vsyncpa %s19, 0
    loop: start=0, step=1, limit=6
    $region2: #{tpu_custom_call.1} parent=1 // loop_pre_header
      _
    $region3: #{tpu_custom_call.1} parent=1 // loop_header
      %s22 = sphi 0, %s26
      %p23 = scmp.ge.s32.totalorder %s22, 6
      %s29 = sphi 0, %s41
      %s30 = sphi 0, %s37
      %s31 = sphi 0, %s29
      %s32 = sphi 0, %s30
      %s33 = sphi 0, %s31
      %s34 = sphi 0, %s32
      %s46 = sphi 0, %s48
      %s49 = sphi 0, %s46
      %s50 = sphi 0, %s49
      %s66 = sphi 0, %s50
      %s72 = sphi 0, %s74
      %s75 = sphi 0, %s72
      %s76 = sphi 0, %s75
      %s92 = sphi 0, %s76
      %s98 = sphi 0, %s100
      %s101 = sphi 0, %s98
      %s102 = sphi 0, %s101
      %s118 = sphi 0, %s102
      %s124 = sphi 0, %s126
      %s127 = sphi 0, %s124
      %s128 = sphi 0, %s127
      %s144 = sphi 0, %s128
      %s150 = sphi 0, %s152
      %s153 = sphi 0, %s150
      %s154 = sphi 0, %s153
      %s170 = sphi 0, %s154
    $region4: #{tpu_custom_call.1} parent=1 // loop_header_branch
      %25 = sbr.rel (%p23) target = $region8
    $region5: #{tpu_custom_call.1} parent=1 // loop_body
      %s27 = ssub.s32 %s22, 1
      %s28 = ssub.s32 %s22, 2
      %s35 = sadd.s32 1, %s30
      %p36 = scmp.ge.s32.totalorder %s35, 2
      %s37 = scalar_select %p36, 0, %s35
      %s38 = sadd.s32 1, %s29
      %s39 = scalar_select %p36, %s38, %s29
      %p40 = scmp.ge.s32.totalorder %s39, 2
      %s41 = scalar_select %p40, 0, %s39
      %s42 = ssub.s32 %s29, %s41
      %s43 = ssub.s32 %s30, %s37
      %s44 = sor.u32 %s42, %s43
      %p45 = scmp.eq.s32.totalorder %s44, 0
      %s47 = sadd.s32 %s46, 1
      %s48 = scalar_select %p45, %s46, %s47
      %p51 = pneg %p45
      %p52 = scmp.eq.s32.totalorder %s22, 3
      %p53 = por %p51, %p52
      %p54 = scmp.ne.s32.totalorder %s46, %s49
      %p55 = scmp.eq.s32.totalorder %s22, 0
      %p56 = por %p54, %p55
      %p57 = scmp.ne.s32.totalorder %s46, %s49
      %p58 = scmp.eq.s32.totalorder %s27, 3
      %p59 = por %p57, %p58
      %p60 = scmp.ne.s32.totalorder %s49, %s50
      %p61 = scmp.eq.s32.totalorder %s27, 0
      %p62 = por %p60, %p61
      %p63 = scmp.ne.s32.totalorder %s49, %s50
      %p64 = scmp.eq.s32.totalorder %s28, 3
      %p65 = por %p63, %p64
      %p67 = scmp.ne.s32.totalorder %s50, %s66
      %p68 = scmp.eq.s32.totalorder %s28, 0
      %p69 = por %p67, %p68
      %s70 = ssub.s32 %s30, %s37
      %p71 = scmp.eq.s32.totalorder %s70, 0
      %s73 = sadd.s32 %s72, 1
      %s74 = scalar_select %p71, %s72, %s73
      %p77 = pneg %p71
      %p78 = scmp.eq.s32.totalorder %s22, 3
      %p79 = por %p77, %p78
      %p80 = scmp.ne.s32.totalorder %s72, %s75
      %p81 = scmp.eq.s32.totalorder %s22, 0
      %p82 = por %p80, %p81
      %p83 = scmp.ne.s32.totalorder %s72, %s75
      %p84 = scmp.eq.s32.totalorder %s27, 3
      %p85 = por %p83, %p84
      %p86 = scmp.ne.s32.totalorder %s75, %s76
      %p87 = scmp.eq.s32.totalorder %s27, 0
      %p88 = por %p86, %p87
      %p89 = scmp.ne.s32.totalorder %s75, %s76
      %p90 = scmp.eq.s32.totalorder %s28, 3
      %p91 = por %p89, %p90
      %p93 = scmp.ne.s32.totalorder %s76, %s92
      %p94 = scmp.eq.s32.totalorder %s28, 0
      %p95 = por %p93, %p94
      %s96 = ssub.s32 %s30, %s37
      %p97 = scmp.eq.s32.totalorder %s96, 0
      %s99 = sadd.s32 %s98, 1
      %s100 = scalar_select %p97, %s98, %s99
      %p103 = pneg %p97
      %p104 = scmp.eq.s32.totalorder %s22, 3
      %p105 = por %p103, %p104
      %p106 = scmp.ne.s32.totalorder %s98, %s101
      %p107 = scmp.eq.s32.totalorder %s22, 0
      %p108 = por %p106, %p107
      %p109 = scmp.ne.s32.totalorder %s98, %s101
      %p110 = scmp.eq.s32.totalorder %s27, 3
      %p111 = por %p109, %p110
      %p112 = scmp.ne.s32.totalorder %s101, %s102
      %p113 = scmp.eq.s32.totalorder %s27, 0
      %p114 = por %p112, %p113
      %p115 = scmp.ne.s32.totalorder %s101, %s102
      %p116 = scmp.eq.s32.totalorder %s28, 3
      %p117 = por %p115, %p116
      %p119 = scmp.ne.s32.totalorder %s102, %s118
      %p120 = scmp.eq.s32.totalorder %s28, 0
      %p121 = por %p119, %p120
      %s122 = ssub.s32 %s30, %s37
      %p123 = scmp.eq.s32.totalorder %s122, 0
      %s125 = sadd.s32 %s124, 1
      %s126 = scalar_select %p123, %s124, %s125
      %p129 = pneg %p123
      %p130 = scmp.eq.s32.totalorder %s22, 3
      %p131 = por %p129, %p130
      %p132 = scmp.ne.s32.totalorder %s124, %s127
      %p133 = scmp.eq.s32.totalorder %s22, 0
      %p134 = por %p132, %p133
      %p135 = scmp.ne.s32.totalorder %s124, %s127
      %p136 = scmp.eq.s32.totalorder %s27, 3
      %p137 = por %p135, %p136
      %p138 = scmp.ne.s32.totalorder %s127, %s128
      %p139 = scmp.eq.s32.totalorder %s27, 0
      %p140 = por %p138, %p139
      %p141 = scmp.ne.s32.totalorder %s127, %s128
      %p142 = scmp.eq.s32.totalorder %s28, 3
      %p143 = por %p141, %p142
      %p145 = scmp.ne.s32.totalorder %s128, %s144
      %p146 = scmp.eq.s32.totalorder %s28, 0
      %p147 = por %p145, %p146
      %s148 = ssub.s32 %s29, %s41
      %p149 = scmp.eq.s32.totalorder %s148, 0
      %s151 = sadd.s32 %s150, 1
      %s152 = scalar_select %p149, %s150, %s151
      %p155 = pneg %p149
      %p156 = scmp.eq.s32.totalorder %s22, 3
      %p157 = por %p155, %p156
      %p158 = scmp.ne.s32.totalorder %s150, %s153
      %p159 = scmp.eq.s32.totalorder %s22, 0
      %p160 = por %p158, %p159
      %p161 = scmp.ne.s32.totalorder %s150, %s153
      %p162 = scmp.eq.s32.totalorder %s27, 3
      %p163 = por %p161, %p162
      %p164 = scmp.ne.s32.totalorder %s153, %s154
      %p165 = scmp.eq.s32.totalorder %s27, 0
      %p166 = por %p164, %p165
      %p167 = scmp.ne.s32.totalorder %s153, %s154
      %p168 = scmp.eq.s32.totalorder %s28, 3
      %p169 = por %p167, %p168
      %p171 = scmp.ne.s32.totalorder %s154, %s170
      %p172 = scmp.eq.s32.totalorder %s28, 0
      %p173 = por %p171, %p172
      %p174 = scmp.le.s32.totalorder 1, %s22
      %p175 = scmp.lt.s32.totalorder %s22, 5
      %p176 = pnand %p174, %p175
      %p177 = pneg %p176
      // Predicated region
      $region9: #{tpu_custom_call.1} parent=5 // pred_check
        _
      $region10: #{tpu_custom_call.1} parent=5 // pred_check_branch
        %179 = sbr.rel (%p176) target = $region12
      $region11: #{tpu_custom_call.1} parent=5 // pred_region
        %s180 = ssub.s32 %s22, 1
      $region12: #{tpu_custom_call.1} parent=5 // pred_fallthru
        _
      %p181 = scmp.lt.s32.totalorder %s22, 4
      // Predicated region
      $region13: #{tpu_custom_call.1} parent=5 // pred_check
        %p182 = pneg %p181
      $region14: #{tpu_custom_call.1} parent=5 // pred_check_branch
        %184 = sbr.rel (%p182) target = $region16
      $region15: #{tpu_custom_call.1} parent=5 // pred_region
        // Predicated region
        $region17: #{tpu_custom_call.1} parent=15 // pred_check
          %p185 = pneg %p56
        $region18: #{tpu_custom_call.1} parent=15 // pred_check_branch
          %187 = sbr.rel (%p185) target = $region20
        $region19: #{tpu_custom_call.1} parent=15 // pred_region
          %s188 = sand.u32 %s46, 1
          %s189 = scalar_lea.sflag [#allocation6], %s188
          %s190 = sand.u32 %s46, 1
          %s191 = smul.addr %s190, 128
          %s192 = scalar_lea.vmem [#allocation5], %s191
          %s193 = smul.u32 16, %s29
          %s195 = ssub.s32 2048, 2048
          %196 = vsyncadd %s189, %s195
          %s197 = smul.addr %s193, 2
          %s198 = sadd.s32 %s30, %s197
          %s199 = smul.addr %s198, 128
          %s200 = scalar_lea.hbm %s0, %s199
          %s201 = sshll.u32 %s192, 4
          %s202 = int_to_ptr.vmem [resolvable:$true] %s201
          %207 = dma.hbm_to_vmem [thread:$0]  %s200, 2048, %s202, %s189, 256, 128, 8
        $region20: #{tpu_custom_call.1} parent=15 // pred_fallthru
          _
        // Predicated region
        $region21: #{tpu_custom_call.1} parent=15 // pred_check
          %p208 = pneg %p82
        $region22: #{tpu_custom_call.1} parent=15 // pred_check_branch
          %210 = sbr.rel (%p208) target = $region24
        $region23: #{tpu_custom_call.1} parent=15 // pred_region
          %s211 = sand.u32 %s22, 1
          %s212 = scalar_lea.sflag [#allocation9], %s211
          %s213 = sand.u32 %s72, 1
          %s214 = smul.addr %s213, 128
          %s215 = scalar_lea.vmem [#allocation8], %s214
          %s216 = smul.u32 16, %s30
          %s218 = ssub.s32 2048, 2048
          %219 = vsyncadd %s212, %s218
          %s220 = smul.addr %s216, 128
          %s221 = scalar_lea.hbm %s1, %s220
          %s222 = sshll.u32 %s215, 4
          %s223 = int_to_ptr.vmem [resolvable:$true] %s222
          %228 = dma.hbm_to_vmem [thread:$0]  %s221, 2048, %s223, %s212, 128, 128, 8
        $region24: #{tpu_custom_call.1} parent=15 // pred_fallthru
          _
        // Predicated region
        $region25: #{tpu_custom_call.1} parent=15 // pred_check
          %p229 = pneg %p108
        $region26: #{tpu_custom_call.1} parent=15 // pred_check_branch
          %231 = sbr.rel (%p229) target = $region28
        $region27: #{tpu_custom_call.1} parent=15 // pred_region
          %s232 = sand.u32 %s22, 1
          %s233 = scalar_lea.sflag [#allocation9], %s232
          %s234 = sand.u32 %s98, 1
          %s235 = smul.addr %s234, 128
          %s236 = scalar_lea.vmem [#allocation10], %s235
          %s237 = smul.u32 16, %s30
          %s239 = ssub.s32 2048, 2048
          %240 = vsyncadd %s233, %s239
          %s241 = smul.addr %s237, 128
          %s242 = scalar_lea.hbm %s2, %s241
          %s243 = sshll.u32 %s236, 4
          %s244 = int_to_ptr.vmem [resolvable:$true] %s243
          %249 = dma.hbm_to_vmem [thread:$0]  %s242, 2048, %s244, %s233, 128, 128, 8
        $region28: #{tpu_custom_call.1} parent=15 // pred_fallthru
          _
        // Predicated region
        $region29: #{tpu_custom_call.1} parent=15 // pred_check
          %p250 = pneg %p134
        $region30: #{tpu_custom_call.1} parent=15 // pred_check_branch
          %252 = sbr.rel (%p250) target = $region32
        $region31: #{tpu_custom_call.1} parent=15 // pred_region
          %s253 = sand.u32 %s124, 1
          %s254 = scalar_lea.sflag [#allocation12], %s253
          %s255 = sand.u32 %s124, 1
          %s256 = smul.addr %s255, 32
          %s257 = scalar_lea.vmem [#allocation11], %s256
          %s258 = smul.u32 4, %s30
          %s260 = ssub.s32 512, 512
          %261 = vsyncadd %s254, %s260
          %s262 = smul.addr %s258, 128
          %s263 = scalar_lea.hbm %s3, %s262
          %s264 = sshll.u32 %s257, 4
          %s265 = int_to_ptr.vmem [resolvable:$true] %s264
          %270 = dma.hbm_to_vmem [thread:$0]  %s263, 512, %s265, %s254, 128, 128, 8
        $region32: #{tpu_custom_call.1} parent=15 // pred_fallthru
          _
      $region16: #{tpu_custom_call.1} parent=5 // pred_fallthru
        _
      %p271 = scmp.le.s32.totalorder 1, %s22
      %p272 = scmp.lt.s32.totalorder %s22, 5
      %p273 = pnand %p271, %p272
      %p274 = pneg %p273
      // Predicated region
      $region33: #{tpu_custom_call.1} parent=5 // pred_check
        _
      $region34: #{tpu_custom_call.1} parent=5 // pred_check_branch
        %276 = sbr.rel (%p273) target = $region36
      $region35: #{tpu_custom_call.1} parent=5 // pred_region
        %s277 = ssub.s32 %s22, 1
        %s278 = sand.u32 %s49, 1
        %s279 = scalar_lea.sflag [#allocation6], %s278
        %s280 = sand.u32 %s49, 1
        %s281 = smul.addr %s280, 128
        %s282 = scalar_lea.vmem [#allocation5], %s281
        // Predicated region
        $region37: #{tpu_custom_call.1} parent=35 // pred_check
          %p283 = pneg %p62
        $region38: #{tpu_custom_call.1} parent=35 // pred_check_branch
          %285 = sbr.rel (%p283) target = $region40
        $region39: #{tpu_custom_call.1} parent=35 // pred_region
          %286 = dma.done %s279, 2048
        $region40: #{tpu_custom_call.1} parent=35 // pred_fallthru
          _
        %s287 = sand.u32 %s27, 1
        %s288 = scalar_lea.sflag [#allocation9], %s287
        %s289 = sand.u32 %s75, 1
        %s290 = smul.addr %s289, 128
        %s291 = scalar_lea.vmem [#allocation8], %s290
        // Predicated region
        $region41: #{tpu_custom_call.1} parent=35 // pred_check
          %p292 = pneg %p88
        $region42: #{tpu_custom_call.1} parent=35 // pred_check_branch
          %294 = sbr.rel (%p292) target = $region44
        $region43: #{tpu_custom_call.1} parent=35 // pred_region
          %295 = dma.done %s288, 2048
        $region44: #{tpu_custom_call.1} parent=35 // pred_fallthru
          _
        %s296 = sand.u32 %s27, 1
        %s297 = scalar_lea.sflag [#allocation9], %s296
        %s298 = sand.u32 %s101, 1
        %s299 = smul.addr %s298, 128
        %s300 = scalar_lea.vmem [#allocation10], %s299
        // Predicated region
        $region45: #{tpu_custom_call.1} parent=35 // pred_check
          %p301 = pneg %p114
        $region46: #{tpu_custom_call.1} parent=35 // pred_check_branch
          %303 = sbr.rel (%p301) target = $region48
        $region47: #{tpu_custom_call.1} parent=35 // pred_region
          %304 = dma.done %s297, 2048
        $region48: #{tpu_custom_call.1} parent=35 // pred_fallthru
          _
        %s305 = sand.u32 %s127, 1
        %s306 = scalar_lea.sflag [#allocation12], %s305
        %s307 = sand.u32 %s127, 1
        %s308 = smul.addr %s307, 32
        %s309 = scalar_lea.vmem [#allocation11], %s308
        // Predicated region
        $region49: #{tpu_custom_call.1} parent=35 // pred_check
          %p310 = pneg %p140
        $region50: #{tpu_custom_call.1} parent=35 // pred_check_branch
          %312 = sbr.rel (%p310) target = $region52
        $region51: #{tpu_custom_call.1} parent=35 // pred_region
          %313 = dma.done %s306, 512
        $region52: #{tpu_custom_call.1} parent=35 // pred_fallthru
          _
        %s314 = sand.u32 %s49, 1
        %s315 = scalar_lea.sflag [#allocation6], %s314
        %s316 = sand.u32 %s49, 1
        %s317 = smul.addr %s316, 128
        %s318 = scalar_lea.vmem [#allocation5], %s317
        %p319 = pneg %p62
        %p320 = pneg %p59
        %s321 = sand.u32 %s27, 1
        %s322 = scalar_lea.sflag [#allocation9], %s321
        %s323 = sand.u32 %s75, 1
        %s324 = smul.addr %s323, 128
        %s325 = scalar_lea.vmem [#allocation8], %s324
        %p326 = pneg %p88
        %p327 = pneg %p85
        %s328 = sand.u32 %s27, 1
        %s329 = scalar_lea.sflag [#allocation9], %s328
        %s330 = sand.u32 %s101, 1
        %s331 = smul.addr %s330, 128
        %s332 = scalar_lea.vmem [#allocation10], %s331
        %p333 = pneg %p114
        %p334 = pneg %p111
        %s335 = sand.u32 %s127, 1
        %s336 = scalar_lea.sflag [#allocation12], %s335
        %s337 = sand.u32 %s127, 1
        %s338 = smul.addr %s337, 32
        %s339 = scalar_lea.vmem [#allocation11], %s338
        %p340 = pneg %p140
        %p341 = pneg %p137
        %p342 = pneg %p166
        %p343 = pneg %p163
        %s344 = sand.u32 %s153, 1
        %s345 = scalar_lea.sflag [#allocation7], %s344
        %s346 = sand.u32 %s153, 1
        %s347 = smul.addr %s346, 8
        %s348 = scalar_lea.vmem [#allocation13], %s347
        %s349 = smul.u32 16, %s31
        %s350 = smul.u32 16, %s32
        %s351 = smul.u32 16, %s32
        %s352 = smul.u32 4, %s32
        %p355 = scmp.eq.s32.totalorder %s32, 0
        // Predicated region
        $region53: #{tpu_custom_call.1} parent=35 // pred_check
          %p356 = pneg %p355
        $region54: #{tpu_custom_call.1} parent=35 // pred_check_branch
          %358 = sbr.rel (%p356) target = $region56
        $region55: #{tpu_custom_call.1} parent=35 // pred_region
          %359 = vst [vmem:[#allocation2] sm:$0xff] 0.0
          %360 = vst [vmem:[#allocation2 + $0x8] sm:$0xff] 0.0
          %361 = vst [vmem:[#allocation2 + $0x10] sm:$0xff] 0.0
          %362 = vst [vmem:[#allocation2 + $0x18] sm:$0xff] 0.0
          %363 = vst [vmem:[#allocation2 + $0x20] sm:$0xff] 0.0
          %364 = vst [vmem:[#allocation2 + $0x28] sm:$0xff] 0.0
          %365 = vst [vmem:[#allocation2 + $0x30] sm:$0xff] 0.0
          %366 = vst [vmem:[#allocation2 + $0x38] sm:$0xff] 0.0
          %367 = vst [vmem:[#allocation2 + $0x40] sm:$0xff] 0.0
          %368 = vst [vmem:[#allocation2 + $0x48] sm:$0xff] 0.0
          %369 = vst [vmem:[#allocation2 + $0x50] sm:$0xff] 0.0
          %370 = vst [vmem:[#allocation2 + $0x58] sm:$0xff] 0.0
          %371 = vst [vmem:[#allocation2 + $0x60] sm:$0xff] 0.0
          %372 = vst [vmem:[#allocation2 + $0x68] sm:$0xff] 0.0
          %373 = vst [vmem:[#allocation2 + $0x70] sm:$0xff] 0.0
          %374 = vst [vmem:[#allocation2 + $0x78] sm:$0xff] 0.0
          %vm375 = vcmask 0
          %376 = vst.msk [vmem:[#allocation3] sm:$0x1] %vm375, 0.0
          %377 = vst.msk [vmem:[#allocation4] sm:$0x1] %vm375, 0
        $region56: #{tpu_custom_call.1} parent=35 // pred_fallthru
          _
        %v378 = vld [vmem:[%s291] sm:$0xff]
        %v379 = vld [vmem:[%s291 + $0x8] sm:$0xff]
        %v380 = vld [vmem:[%s291 + $0x10] sm:$0xff]
        %v381 = vld [vmem:[%s291 + $0x18] sm:$0xff]
        %v382 = vld [vmem:[%s291 + $0x20] sm:$0xff]
        %v383 = vld [vmem:[%s291 + $0x28] sm:$0xff]
        %v384 = vld [vmem:[%s291 + $0x30] sm:$0xff]
        %v385 = vld [vmem:[%s291 + $0x38] sm:$0xff]
        %v386 = vld [vmem:[%s291 + $0x40] sm:$0xff]
        %v387 = vld [vmem:[%s291 + $0x48] sm:$0xff]
        %v388 = vld [vmem:[%s291 + $0x50] sm:$0xff]
        %v389 = vld [vmem:[%s291 + $0x58] sm:$0xff]
        %v390 = vld [vmem:[%s291 + $0x60] sm:$0xff]
        %v391 = vld [vmem:[%s291 + $0x68] sm:$0xff]
        %v392 = vld [vmem:[%s291 + $0x70] sm:$0xff]
        %v393 = vld [vmem:[%s291 + $0x78] sm:$0xff]
        %v394 = vld [vmem:[%s282] sm:$0xff]
        %v395 = vld [vmem:[%s282 + $0x8] sm:$0xff]
        %v396 = vld [vmem:[%s282 + $0x10] sm:$0xff]
        %v397 = vld [vmem:[%s282 + $0x18] sm:$0xff]
        %v398 = vld [vmem:[%s282 + $0x20] sm:$0xff]
        %v399 = vld [vmem:[%s282 + $0x28] sm:$0xff]
        %v400 = vld [vmem:[%s282 + $0x30] sm:$0xff]
        %v401 = vld [vmem:[%s282 + $0x38] sm:$0xff]
        %v402 = vld [vmem:[%s282 + $0x40] sm:$0xff]
        %v403 = vld [vmem:[%s282 + $0x48] sm:$0xff]
        %v404 = vld [vmem:[%s282 + $0x50] sm:$0xff]
        %v405 = vld [vmem:[%s282 + $0x58] sm:$0xff]
        %v406 = vld [vmem:[%s282 + $0x60] sm:$0xff]
        %v407 = vld [vmem:[%s282 + $0x68] sm:$0xff]
        %v408 = vld [vmem:[%s282 + $0x70] sm:$0xff]
        %v409 = vld [vmem:[%s282 + $0x78] sm:$0xff]
        %v410 = vld [vmem:[#allocation2] sm:$0xff]
        %v411 = vld [vmem:[#allocation2 + $0x8] sm:$0xff]
        %v412 = vld [vmem:[#allocation2 + $0x10] sm:$0xff]
        %v413 = vld [vmem:[#allocation2 + $0x18] sm:$0xff]
        %v414 = vld [vmem:[#allocation2 + $0x20] sm:$0xff]
        %v415 = vld [vmem:[#allocation2 + $0x28] sm:$0xff]
        %v416 = vld [vmem:[#allocation2 + $0x30] sm:$0xff]
        %v417 = vld [vmem:[#allocation2 + $0x38] sm:$0xff]
        %v418 = vld [vmem:[#allocation2 + $0x40] sm:$0xff]
        %v419 = vld [vmem:[#allocation2 + $0x48] sm:$0xff]
        %v420 = vld [vmem:[#allocation2 + $0x50] sm:$0xff]
        %v421 = vld [vmem:[#allocation2 + $0x58] sm:$0xff]
        %v422 = vld [vmem:[#allocation2 + $0x60] sm:$0xff]
        %v423 = vld [vmem:[#allocation2 + $0x68] sm:$0xff]
        %v424 = vld [vmem:[#allocation2 + $0x70] sm:$0xff]
        %v425 = vld [vmem:[#allocation2 + $0x78] sm:$0xff]
        %426 = vmatprep.subr.mxu0 0.0
        %427 = vmatpush1.msra.mxu0 %v378
        %428 = vmatprep.subr.mxu0 0.0
        %429 = vmatpush1.msra.mxu0 %v379
        %430 = vmatprep.subr.mxu0 0.0
        %431 = vmatpush1.msra.mxu0 %v380
        %432 = vmatprep.subr.mxu0 0.0
        %433 = vmatpush1.msra.mxu0 %v381
        %434 = vmatprep.subr.mxu0 0.0
        %435 = vmatpush1.msra.mxu0 %v382
        %436 = vmatprep.subr.mxu0 0.0
        %437 = vmatpush1.msra.mxu0 %v383
        %438 = vmatprep.subr.mxu0 0.0
        %439 = vmatpush1.msra.mxu0 %v384
        %440 = vmatprep.subr.mxu0 0.0
        %441 = vmatpush1.msra.mxu0 %v385
        %442 = vmatprep.subr.mxu0 0.0
        %443 = vmatpush1.msra.mxu0 %v386
        %444 = vmatprep.subr.mxu0 0.0
        %445 = vmatpush1.msra.mxu0 %v387
        %446 = vmatprep.subr.mxu0 0.0
        %447 = vmatpush1.msra.mxu0 %v388
        %448 = vmatprep.subr.mxu0 0.0
        %449 = vmatpush1.msra.mxu0 %v389
        %450 = vmatprep.subr.mxu0 0.0
        %451 = vmatpush1.msra.mxu0 %v390
        %452 = vmatprep.subr.mxu0 0.0
        %453 = vmatpush1.msra.mxu0 %v391
        %454 = vmatprep.subr.mxu0 0.0
        %455 = vmatpush1.msra.mxu0 %v392
        %456 = vmatprep.subr.mxu0 0.0
        %457 = vmatpush1.msra.mxu0 %v393
        %458 = vmatprep.subr.mxu0 0.0
        %459 = vmatpush1.msra.mxu0 0.0
        %460 = vmatprep.subr.mxu0 0.0
        %461 = vmatpush1.msra.mxu0 0.0
        %462 = vmatprep.subr.mxu0 0.0
        %463 = vmatpush1.msra.mxu0 0.0
        %464 = vmatprep.subr.mxu0 0.0
        %465 = vmatpush1.msra.mxu0 0.0
        %466 = vmatprep.subr.mxu0 0.0
        %467 = vmatpush1.msra.mxu0 0.0
        %468 = vmatprep.subr.mxu0 0.0
        %469 = vmatpush1.msra.mxu0 0.0
        %470 = vmatprep.subr.mxu0 0.0
        %471 = vmatpush1.msra.mxu0 0.0
        %472 = vmatprep.subr.mxu0 0.0
        %473 = vmatpush1.msra.mxu0 0.0
        %474 = vmatprep.subr.mxu0 0.0
        %475 = vmatpush1.msra.mxu0 0.0
        %476 = vmatprep.subr.mxu0 0.0
        %477 = vmatpush1.msra.mxu0 0.0
        %478 = vmatprep.subr.mxu0 0.0
        %479 = vmatpush1.msra.mxu0 0.0
        %480 = vmatprep.subr.mxu0 0.0
        %481 = vmatpush1.msra.mxu0 0.0
        %482 = vmatprep.subr.mxu0 0.0
        %483 = vmatpush1.msra.mxu0 0.0
        %484 = vmatprep.subr.mxu0 0.0
        %485 = vmatpush1.msra.mxu0 0.0
        %486 = vmatprep.subr.mxu0 0.0
        %487 = vmatpush1.msra.mxu0 0.0
        %488 = vmatprep.subr.mxu0 0.0
        %489 = vmatpush1.msra.mxu0 0.0
        %490 = vmatprep.mubr.f32.mxu0 0.0
        %491 = vmatmul.mubr.f32.gmra.mrb[0].mxu0 %v394
        %v492 = vpop.f32.mrb[0].mxu0
        %v493 = vadd.f32 0.0, %v492
        %v494 = vpop.f32.mrb[0].mxu0
        %495 = vmatprep.mubr.f32.mxu0 0.0
        %496 = vmatmul.mubr.f32.gmra.mrb[0].mxu0 %v395
        %v497 = vpop.f32.mrb[0].mxu0
        %v498 = vadd.f32 0.0, %v497
        %v499 = vpop.f32.mrb[0].mxu0
        %500 = vmatprep.mubr.f32.mxu0 0.0
        %501 = vmatmul.mubr.f32.gmra.mrb[0].mxu0 %v396
        %v502 = vpop.f32.mrb[0].mxu0
        %v503 = vadd.f32 0.0, %v502
        %v504 = vpop.f32.mrb[0].mxu0
        %505 = vmatprep.mubr.f32.mxu0 0.0
        %506 = vmatmul.mubr.f32.gmra.mrb[0].mxu0 %v397
        %v507 = vpop.f32.mrb[0].mxu0
        %v508 = vadd.f32 0.0, %v507
        %v509 = vpop.f32.mrb[0].mxu0
        %510 = vmatprep.mubr.f32.mxu0 0.0
        %511 = vmatmul.mubr.f32.gmra.mrb[0].mxu0 %v398
        %v512 = vpop.f32.mrb[0].mxu0
        %v513 = vadd.f32 0.0, %v512
        %v514 = vpop.f32.mrb[0].mxu0
        %515 = vmatprep.mubr.f32.mxu0 0.0
        %516 = vmatmul.mubr.f32.gmra.mrb[0].mxu0 %v399
        %v517 = vpop.f32.mrb[0].mxu0
        %v518 = vadd.f32 0.0, %v517
        %v519 = vpop.f32.mrb[0].mxu0
        %520 = vmatprep.mubr.f32.mxu0 0.0
        %521 = vmatmul.mubr.f32.gmra.mrb[0].mxu0 %v400
        %v522 = vpop.f32.mrb[0].mxu0
        %v523 = vadd.f32 0.0, %v522
        %v524 = vpop.f32.mrb[0].mxu0
        %525 = vmatprep.mubr.f32.mxu0 0.0
        %526 = vmatmul.mubr.f32.gmra.mrb[0].mxu0 %v401
        %v527 = vpop.f32.mrb[0].mxu0
        %v528 = vadd.f32 0.0, %v527
        %v529 = vpop.f32.mrb[0].mxu0
        %530 = vmatprep.mubr.f32.mxu0 0.0
        %531 = vmatmul.mubr.f32.gmra.mrb[0].mxu0 %v402
        %v532 = vpop.f32.mrb[0].mxu0
        %v533 = vadd.f32 0.0, %v532
        %v534 = vpop.f32.mrb[0].mxu0
        %535 = vmatprep.mubr.f32.mxu0 0.0
        %536 = vmatmul.mubr.f32.gmra.mrb[0].mxu0 %v403
        %v537 = vpop.f32.mrb[0].mxu0
        %v538 = vadd.f32 0.0, %v537
        %v539 = vpop.f32.mrb[0].mxu0
        %540 = vmatprep.mubr.f32.mxu0 0.0
        %541 = vmatmul.mubr.f32.gmra.mrb[0].mxu0 %v404
        %v542 = vpop.f32.mrb[0].mxu0
        %v543 = vadd.f32 0.0, %v542
        %v544 = vpop.f32.mrb[0].mxu0
        %545 = vmatprep.mubr.f32.mxu0 0.0
        %546 = vmatmul.mubr.f32.gmra.mrb[0].mxu0 %v405
        %v547 = vpop.f32.mrb[0].mxu0
        %v548 = vadd.f32 0.0, %v547
        %v549 = vpop.f32.mrb[0].mxu0
        %550 = vmatprep.mubr.f32.mxu0 0.0
        %551 = vmatmul.mubr.f32.gmra.mrb[0].mxu0 %v406
        %v552 = vpop.f32.mrb[0].mxu0
        %v553 = vadd.f32 0.0, %v552
        %v554 = vpop.f32.mrb[0].mxu0
        %555 = vmatprep.mubr.f32.mxu0 0.0
        %556 = vmatmul.mubr.f32.gmra.mrb[0].mxu0 %v407
        %v557 = vpop.f32.mrb[0].mxu0
        %v558 = vadd.f32 0.0, %v557
        %v559 = vpop.f32.mrb[0].mxu0
        %560 = vmatprep.mubr.f32.mxu0 0.0
        %561 = vmatmul.mubr.f32.gmra.mrb[0].mxu0 %v408
        %v562 = vpop.f32.mrb[0].mxu0
        %v563 = vadd.f32 0.0, %v562
        %v564 = vpop.f32.mrb[0].mxu0
        %565 = vmatprep.mubr.f32.mxu0 0.0
        %566 = vmatmul.mubr.f32.gmra.mrb[0].mxu0 %v409
        %v567 = vpop.f32.mrb[0].mxu0
        %v568 = vadd.f32 0.0, %v567
        %v569 = vpop.f32.mrb[0].mxu0
        %570 = vdwg.mxu0
        %v571 = vadd.f32 %v410, %v493
        %v572 = vadd.f32 %v411, %v498
        %v573 = vadd.f32 %v412, %v503
        %v574 = vadd.f32 %v413, %v508
        %v575 = vadd.f32 %v414, %v513
        %v576 = vadd.f32 %v415, %v518
        %v577 = vadd.f32 %v416, %v523
        %v578 = vadd.f32 %v417, %v528
        %v579 = vadd.f32 %v418, %v533
        %v580 = vadd.f32 %v419, %v538
        %v581 = vadd.f32 %v420, %v543
        %v582 = vadd.f32 %v421, %v548
        %v583 = vadd.f32 %v422, %v553
        %v584 = vadd.f32 %v423, %v558
        %v585 = vadd.f32 %v424, %v563
        %v586 = vadd.f32 %v425, %v568
        %587 = vst [vmem:[#allocation2] sm:$0xff] %v571
        %588 = vst [vmem:[#allocation2 + $0x8] sm:$0xff] %v572
        %589 = vst [vmem:[#allocation2 + $0x10] sm:$0xff] %v573
        %590 = vst [vmem:[#allocation2 + $0x18] sm:$0xff] %v574
        %591 = vst [vmem:[#allocation2 + $0x20] sm:$0xff] %v575
        %592 = vst [vmem:[#allocation2 + $0x28] sm:$0xff] %v576
        %593 = vst [vmem:[#allocation2 + $0x30] sm:$0xff] %v577
        %594 = vst [vmem:[#allocation2 + $0x38] sm:$0xff] %v578
        %595 = vst [vmem:[#allocation2 + $0x40] sm:$0xff] %v579
        %596 = vst [vmem:[#allocation2 + $0x48] sm:$0xff] %v580
        %597 = vst [vmem:[#allocation2 + $0x50] sm:$0xff] %v581
        %598 = vst [vmem:[#allocation2 + $0x58] sm:$0xff] %v582
        %599 = vst [vmem:[#allocation2 + $0x60] sm:$0xff] %v583
        %600 = vst [vmem:[#allocation2 + $0x68] sm:$0xff] %v584
        %601 = vst [vmem:[#allocation2 + $0x70] sm:$0xff] %v585
        %602 = vst [vmem:[#allocation2 + $0x78] sm:$0xff] %v586
        %p603 = scmp.eq.s32.totalorder %s31, 0
        // Predicated region
        $region57: #{tpu_custom_call.1} parent=35 // pred_check
          %p604 = pneg %p603
        $region58: #{tpu_custom_call.1} parent=35 // pred_check_branch
          %606 = sbr.rel (%p604) target = $region60
        $region59: #{tpu_custom_call.1} parent=35 // pred_region
          %v607 = vld [vmem:[%s309] sm:$0xff]
          %v608 = vld [vmem:[%s309 + $0x8] sm:$0xff]
          %v609 = vld [vmem:[%s309 + $0x10] sm:$0xff]
          %v610 = vld [vmem:[%s309 + $0x18] sm:$0xff]
          %vm611 = vnez %v607
          %vm612 = vnez %v608
          %vm613 = vnez %v609
          %vm614 = vnez %v610
          %v615 = vld [vmem:[%s300] sm:$0xff]
          %v616 = vld [vmem:[%s300 + $0x8] sm:$0xff]
          %v617 = vld [vmem:[%s300 + $0x10] sm:$0xff]
          %v618 = vld [vmem:[%s300 + $0x18] sm:$0xff]
          %v619 = vld [vmem:[%s300 + $0x20] sm:$0xff]
          %v620 = vld [vmem:[%s300 + $0x28] sm:$0xff]
          %v621 = vld [vmem:[%s300 + $0x30] sm:$0xff]
          %v622 = vld [vmem:[%s300 + $0x38] sm:$0xff]
          %v623 = vld [vmem:[%s300 + $0x40] sm:$0xff]
          %v624 = vld [vmem:[%s300 + $0x48] sm:$0xff]
          %v625 = vld [vmem:[%s300 + $0x50] sm:$0xff]
          %v626 = vld [vmem:[%s300 + $0x58] sm:$0xff]
          %v627 = vld [vmem:[%s300 + $0x60] sm:$0xff]
          %v628 = vld [vmem:[%s300 + $0x68] sm:$0xff]
          %v629 = vld [vmem:[%s300 + $0x70] sm:$0xff]
          %v630 = vld [vmem:[%s300 + $0x78] sm:$0xff]
          %v631 = vsub.f32 %v378, %v615
          %v632 = vsub.f32 %v379, %v616
          %v633 = vsub.f32 %v380, %v617
          %v634 = vsub.f32 %v381, %v618
          %v635 = vsub.f32 %v382, %v619
          %v636 = vsub.f32 %v383, %v620
          %v637 = vsub.f32 %v384, %v621
          %v638 = vsub.f32 %v385, %v622
          %v639 = vsub.f32 %v386, %v623
          %v640 = vsub.f32 %v387, %v624
          %v641 = vsub.f32 %v388, %v625
          %v642 = vsub.f32 %v389, %v626
          %v643 = vsub.f32 %v390, %v627
          %v644 = vsub.f32 %v391, %v628
          %v645 = vsub.f32 %v392, %v629
          %v646 = vsub.f32 %v393, %v630
          %v647 = vld [vmem:[#allocation3] sm:$0x1]
          %v648 = vmul.f32 %v631, %v631
          %v649 = vmul.f32 %v632, %v632
          %v650 = vmul.f32 %v633, %v633
          %v651 = vmul.f32 %v634, %v634
          %v652 = vmul.f32 %v635, %v635
          %v653 = vmul.f32 %v636, %v636
          %v654 = vmul.f32 %v637, %v637
          %v655 = vmul.f32 %v638, %v638
          %v656 = vmul.f32 %v639, %v639
          %v657 = vmul.f32 %v640, %v640
          %v658 = vmul.f32 %v641, %v641
          %v659 = vmul.f32 %v642, %v642
          %v660 = vmul.f32 %v643, %v643
          %v661 = vmul.f32 %v644, %v644
          %v662 = vmul.f32 %v645, %v645
          %v663 = vmul.f32 %v646, %v646
          %v664 = vsel %vm611, 16843009, 0
          %v665 = vsel %vm612, 16843009, 0
          %v666 = vsel %vm613, 16843009, 0
          %v667 = vsel %vm614, 16843009, 0
          %v668 = vunpack.c.0.s8 %v664
          %v669 = vunpack.c.1.s8 %v664
          %v670 = vunpack.c.2.s8 %v664
          %v671 = vunpack.c.3.s8 %v664
          %v672 = vunpack.c.0.s8 %v665
          %v673 = vunpack.c.1.s8 %v665
          %v674 = vunpack.c.2.s8 %v665
          %v675 = vunpack.c.3.s8 %v665
          %v676 = vunpack.c.0.s8 %v666
          %v677 = vunpack.c.1.s8 %v666
          %v678 = vunpack.c.2.s8 %v666
          %v679 = vunpack.c.3.s8 %v666
          %v680 = vunpack.c.0.s8 %v667
          %v681 = vunpack.c.1.s8 %v667
          %v682 = vunpack.c.2.s8 %v667
          %v683 = vunpack.c.3.s8 %v667
          %v684 = vpack.c.b16 %v668, %v668
          %v685 = vpack.c.b8 %v684, %v684
          %v686 = vpack.c.b16 %v669, %v669
          %v687 = vpack.c.b8 %v686, %v686
          %v688 = vpack.c.b16 %v670, %v670
          %v689 = vpack.c.b8 %v688, %v688
          %v690 = vpack.c.b16 %v671, %v671
          %v691 = vpack.c.b8 %v690, %v690
          %v692 = vpack.c.b16 %v672, %v672
          %v693 = vpack.c.b8 %v692, %v692
          %v694 = vpack.c.b16 %v673, %v673
          %v695 = vpack.c.b8 %v694, %v694
          %v696 = vpack.c.b16 %v674, %v674
          %v697 = vpack.c.b8 %v696, %v696
          %v698 = vpack.c.b16 %v675, %v675
          %v699 = vpack.c.b8 %v698, %v698
          %v700 = vpack.c.b16 %v676, %v676
          %v701 = vpack.c.b8 %v700, %v700
          %v702 = vpack.c.b16 %v677, %v677
          %v703 = vpack.c.b8 %v702, %v702
          %v704 = vpack.c.b16 %v678, %v678
          %v705 = vpack.c.b8 %v704, %v704
          %v706 = vpack.c.b16 %v679, %v679
          %v707 = vpack.c.b8 %v706, %v706
          %v708 = vpack.c.b16 %v680, %v680
          %v709 = vpack.c.b8 %v708, %v708
          %v710 = vpack.c.b16 %v681, %v681
          %v711 = vpack.c.b8 %v710, %v710
          %v712 = vpack.c.b16 %v682, %v682
          %v713 = vpack.c.b8 %v712, %v712
          %v714 = vpack.c.b16 %v683, %v683
          %v715 = vpack.c.b8 %v714, %v714
          %vm716 = vnez %v685
          %vm717 = vnez %v687
          %vm718 = vnez %v689
          %vm719 = vnez %v691
          %vm720 = vnez %v693
          %vm721 = vnez %v695
          %vm722 = vnez %v697
          %vm723 = vnez %v699
          %vm724 = vnez %v701
          %vm725 = vnez %v703
          %vm726 = vnez %v705
          %vm727 = vnez %v707
          %vm728 = vnez %v709
          %vm729 = vnez %v711
          %vm730 = vnez %v713
          %vm731 = vnez %v715
          %v732 = vsel %vm716, 16843009, 0
          %v733 = vsel %vm717, 16843009, 0
          %v734 = vsel %vm718, 16843009, 0
          %v735 = vsel %vm719, 16843009, 0
          %v736 = vsel %vm720, 16843009, 0
          %v737 = vsel %vm721, 16843009, 0
          %v738 = vsel %vm722, 16843009, 0
          %v739 = vsel %vm723, 16843009, 0
          %v740 = vsel %vm724, 16843009, 0
          %v741 = vsel %vm725, 16843009, 0
          %v742 = vsel %vm726, 16843009, 0
          %v743 = vsel %vm727, 16843009, 0
          %v744 = vsel %vm728, 16843009, 0
          %v745 = vsel %vm729, 16843009, 0
          %v746 = vsel %vm730, 16843009, 0
          %v747 = vsel %vm731, 16843009, 0
          %v748 = vunpack.c.0.s8 %v732
          %v749 = vunpack.c.0.s8 %v733
          %v750 = vunpack.c.0.s8 %v734
          %v751 = vunpack.c.0.s8 %v735
          %v752 = vunpack.c.0.s8 %v736
          %v753 = vunpack.c.0.s8 %v737
          %v754 = vunpack.c.0.s8 %v738
          %v755 = vunpack.c.0.s8 %v739
          %v756 = vunpack.c.0.s8 %v740
          %v757 = vunpack.c.0.s8 %v741
          %v758 = vunpack.c.0.s8 %v742
          %v759 = vunpack.c.0.s8 %v743
          %v760 = vunpack.c.0.s8 %v744
          %v761 = vunpack.c.0.s8 %v745
          %v762 = vunpack.c.0.s8 %v746
          %v763 = vunpack.c.0.s8 %v747
          %vm764 = vcmp.ne.s32.totalorder %v748, 0
          %vm765 = vcmp.ne.s32.totalorder %v749, 0
          %vm766 = vcmp.ne.s32.totalorder %v750, 0
          %vm767 = vcmp.ne.s32.totalorder %v751, 0
          %vm768 = vcmp.ne.s32.totalorder %v752, 0
          %vm769 = vcmp.ne.s32.totalorder %v753, 0
          %vm770 = vcmp.ne.s32.totalorder %v754, 0
          %vm771 = vcmp.ne.s32.totalorder %v755, 0
          %vm772 = vcmp.ne.s32.totalorder %v756, 0
          %vm773 = vcmp.ne.s32.totalorder %v757, 0
          %vm774 = vcmp.ne.s32.totalorder %v758, 0
          %vm775 = vcmp.ne.s32.totalorder %v759, 0
          %vm776 = vcmp.ne.s32.totalorder %v760, 0
          %vm777 = vcmp.ne.s32.totalorder %v761, 0
          %vm778 = vcmp.ne.s32.totalorder %v762, 0
          %vm779 = vcmp.ne.s32.totalorder %v763, 0
          %v780 = vsel %vm764, %v648, 0.0
          %v781 = vsel %vm765, %v649, 0.0
          %v782 = vsel %vm766, %v650, 0.0
          %v783 = vsel %vm767, %v651, 0.0
          %v784 = vsel %vm768, %v652, 0.0
          %v785 = vsel %vm769, %v653, 0.0
          %v786 = vsel %vm770, %v654, 0.0
          %v787 = vsel %vm771, %v655, 0.0
          %v788 = vsel %vm772, %v656, 0.0
          %v789 = vsel %vm773, %v657, 0.0
          %v790 = vsel %vm774, %v658, 0.0
          %v791 = vsel %vm775, %v659, 0.0
          %v792 = vsel %vm776, %v660, 0.0
          %v793 = vsel %vm777, %v661, 0.0
          %v794 = vsel %vm778, %v662, 0.0
          %v795 = vsel %vm779, %v663, 0.0
          %v796 = vadd.f32 %v780, %v781
          %v797 = vadd.f32 %v796, %v782
          %v798 = vadd.f32 %v797, %v783
          %v799 = vadd.f32 %v798, %v784
          %v800 = vadd.f32 %v799, %v785
          %v801 = vadd.f32 %v800, %v786
          %v802 = vadd.f32 %v801, %v787
          %v803 = vadd.f32 %v802, %v788
          %v804 = vadd.f32 %v803, %v789
          %v805 = vadd.f32 %v804, %v790
          %v806 = vadd.f32 %v805, %v791
          %v807 = vadd.f32 %v806, %v792
          %v808 = vadd.f32 %v807, %v793
          %v809 = vadd.f32 %v808, %v794
          %v810 = vadd.f32 %v809, %v795
          %811 = vadd.xlane.f32.xlu0 %v810
          %v812 = vpop.xlane.xlu0 %811
          %v813 = vrot.slane %v812, 4
          %v814 = vadd.f32 %v812, %v813
          %v815 = vrot.slane %v814, 2
          %v816 = vadd.f32 %v814, %v815
          %v817 = vrot.slane %v816, 1
          %v818 = vadd.f32 %v816, %v817
          %s819 = vtos %v818
          %v820 = vstv %s819
          %v821 = vadd.f32 %v647, %v820
          %vm822 = vcmask 0
          %823 = vst.msk [vmem:[#allocation3] sm:$0x1] %vm822, %v821
          %v824 = vld [vmem:[#allocation4] sm:$0x1]
          %v825 = vsel %vm764, 1, 0
          %v826 = vsel %vm765, 1, 0
          %v827 = vsel %vm766, 1, 0
          %v828 = vsel %vm767, 1, 0
          %v829 = vsel %vm768, 1, 0
          %v830 = vsel %vm769, 1, 0
          %v831 = vsel %vm770, 1, 0
          %v832 = vsel %vm771, 1, 0
          %v833 = vsel %vm772, 1, 0
          %v834 = vsel %vm773, 1, 0
          %v835 = vsel %vm774, 1, 0
          %v836 = vsel %vm775, 1, 0
          %v837 = vsel %vm776, 1, 0
          %v838 = vsel %vm777, 1, 0
          %v839 = vsel %vm778, 1, 0
          %v840 = vsel %vm779, 1, 0
          %v841 = vadd.s32 %v825, %v829
          %v842 = vadd.s32 %v826, %v830
          %v843 = vadd.s32 %v827, %v831
          %v844 = vadd.s32 %v828, %v832
          %v845 = vadd.s32 %v841, %v833
          %v846 = vadd.s32 %v842, %v834
          %v847 = vadd.s32 %v843, %v835
          %v848 = vadd.s32 %v844, %v836
          %v849 = vadd.s32 %v845, %v837
          %v850 = vadd.s32 %v846, %v838
          %v851 = vadd.s32 %v847, %v839
          %v852 = vadd.s32 %v848, %v840
          %v853 = vadd.s32 %v849, %v850
          %v854 = vadd.s32 %v851, %v852
          %v855 = vadd.s32 %v853, %v854
          %v856 = vand.u32 %v855, 65535
          %v857 = vshrl.u32 %v855, 16
          %v858 = vcvt.s32.f32 %v856
          %v859 = vcvt.s32.f32 %v857
          %860 = vadd.xlane.f32.xlu0 %v858
          %v861 = vpop.xlane.xlu0 %860
          %862 = vadd.xlane.f32.xlu0 %v859
          %v863 = vpop.xlane.xlu0 %862
          %v864 = vcvt.f32.s32 %v861
          %v865 = vcvt.f32.s32 %v863
          %v866 = vshll.u32 %v865, 16
          %v867 = vadd.s32 %v866, %v864
          %v868 = vrot.slane %v867, 4
          %v869 = vadd.s32 %v867, %v868
          %v870 = vrot.slane %v869, 2
          %v871 = vadd.s32 %v869, %v870
          %v872 = vrot.slane %v871, 1
          %v873 = vadd.s32 %v871, %v872
          %s874 = vtos %v873
          %v875 = vstv %s874
          %v876 = vadd.s32 %v824, %v875
          %877 = vst.msk [vmem:[#allocation4] sm:$0x1] %vm822, %v876
        $region60: #{tpu_custom_call.1} parent=35 // pred_fallthru
          _
        %p878 = scmp.eq.s32.totalorder %s32, 1
        // Predicated region
        $region61: #{tpu_custom_call.1} parent=35 // pred_check
          %p879 = pneg %p878
        $region62: #{tpu_custom_call.1} parent=35 // pred_check_branch
          %881 = sbr.rel (%p879) target = $region64
        $region63: #{tpu_custom_call.1} parent=35 // pred_region
          %v882 = vld [vmem:[#allocation2] sm:$0xff]
          %v883 = vld [vmem:[#allocation2 + $0x8] sm:$0xff]
          %v884 = vld [vmem:[#allocation2 + $0x10] sm:$0xff]
          %v885 = vld [vmem:[#allocation2 + $0x18] sm:$0xff]
          %v886 = vld [vmem:[#allocation2 + $0x20] sm:$0xff]
          %v887 = vld [vmem:[#allocation2 + $0x28] sm:$0xff]
          %v888 = vld [vmem:[#allocation2 + $0x30] sm:$0xff]
          %v889 = vld [vmem:[#allocation2 + $0x38] sm:$0xff]
          %v890 = vld [vmem:[#allocation2 + $0x40] sm:$0xff]
          %v891 = vld [vmem:[#allocation2 + $0x48] sm:$0xff]
          %v892 = vld [vmem:[#allocation2 + $0x50] sm:$0xff]
          %v893 = vld [vmem:[#allocation2 + $0x58] sm:$0xff]
          %v894 = vld [vmem:[#allocation2 + $0x60] sm:$0xff]
          %v895 = vld [vmem:[#allocation2 + $0x68] sm:$0xff]
          %v896 = vld [vmem:[#allocation2 + $0x70] sm:$0xff]
          %v897 = vld [vmem:[#allocation2 + $0x78] sm:$0xff]
          %v898 = vmul.f32 %v882, %v882
          %v899 = vmul.f32 %v883, %v883
          %v900 = vmul.f32 %v884, %v884
          %v901 = vmul.f32 %v885, %v885
          %v902 = vmul.f32 %v886, %v886
          %v903 = vmul.f32 %v887, %v887
          %v904 = vmul.f32 %v888, %v888
          %v905 = vmul.f32 %v889, %v889
          %v906 = vmul.f32 %v890, %v890
          %v907 = vmul.f32 %v891, %v891
          %v908 = vmul.f32 %v892, %v892
          %v909 = vmul.f32 %v893, %v893
          %v910 = vmul.f32 %v894, %v894
          %v911 = vmul.f32 %v895, %v895
          %v912 = vmul.f32 %v896, %v896
          %v913 = vmul.f32 %v897, %v897
          %v914 = vadd.f32 %v898, %v899
          %v915 = vadd.f32 %v914, %v900
          %v916 = vadd.f32 %v915, %v901
          %v917 = vadd.f32 %v916, %v902
          %v918 = vadd.f32 %v917, %v903
          %v919 = vadd.f32 %v918, %v904
          %v920 = vadd.f32 %v919, %v905
          %v921 = vadd.f32 %v920, %v906
          %v922 = vadd.f32 %v921, %v907
          %v923 = vadd.f32 %v922, %v908
          %v924 = vadd.f32 %v923, %v909
          %v925 = vadd.f32 %v924, %v910
          %v926 = vadd.f32 %v925, %v911
          %v927 = vadd.f32 %v926, %v912
          %v928 = vadd.f32 %v927, %v913
          %929 = vadd.xlane.f32.xlu0 %v928
          %v930 = vpop.xlane.xlu0 %929
          %v931 = vrot.slane %v930, 4
          %v932 = vadd.f32 %v930, %v931
          %v933 = vrot.slane %v932, 2
          %v934 = vadd.f32 %v932, %v933
          %v935 = vrot.slane %v934, 1
          %v936 = vadd.f32 %v934, %v935
          %s937 = vtos %v936
          %v938 = vlaneseq
          %v939 = vand.u32 %v938, 127
          %v940 = vld [vmem:[#allocation3] sm:$0x1]
          %v941 = vld [vmem:[#allocation4] sm:$0x1]
          %v942 = vcvt.s32.f32 %v941
          %vm943 = vcmp.eq.s32.totalorder %v939, 0
          %v944 = vstv %s937
          %v945 = vsel %vm943, %v944, 0.0
          %vm946 = vcmp.eq.s32.totalorder %v939, 1
          %v948 = vlaneseq
          %v949 = vshrl.u32 %v948, 7
          %v950 = vsub.s32 0, %v949
          %v951 = vrot.slane %v940, %v950
          %952 = vset.pattern.permute.xlu0 0
          %953 = vperm.xlu0 %952, %v951
          %v954 = vpop.permute.xlu0 %953
          %v956 = vsel %vm946, %v954, %v945
          %vm957 = vcmp.eq.s32.totalorder %v939, 2
          %v959 = vlaneseq
          %v960 = vshrl.u32 %v959, 7
          %v961 = vsub.s32 0, %v960
          %v962 = vrot.slane %v942, %v961
          %963 = vset.pattern.permute.xlu0 0
          %964 = vperm.xlu0 %963, %v962
          %v965 = vpop.permute.xlu0 %964
          %v967 = vsel %vm957, %v965, %v956
          %968 = vst [vmem:[%s348] sm:$0xff] %v967
        $region64: #{tpu_custom_call.1} parent=35 // pred_fallthru
          _
        %s969 = sand.u32 %s153, 1
        %s970 = scalar_lea.sflag [#allocation7], %s969
        %s971 = sand.u32 %s153, 1
        %s972 = smul.addr %s971, 8
        %s973 = scalar_lea.vmem [#allocation13], %s972
        // Predicated region
        $region65: #{tpu_custom_call.1} parent=35 // pred_check
          %p974 = pneg %p163
        $region66: #{tpu_custom_call.1} parent=35 // pred_check_branch
          %976 = sbr.rel (%p974) target = $region68
        $region67: #{tpu_custom_call.1} parent=35 // pred_region
          %s978 = ssub.s32 128, 128
          %979 = vsyncadd %s970, %s978
          %s980 = smul.addr %s31, 128
          %s981 = scalar_lea.hbm %s4, %s980
          %s983 = sshll.u32 %s973, 4
          %s984 = int_to_ptr.vmem [resolvable:$true] %s983
          %986 = dma.vmem_to_hbm [thread:$0]  %s984, 128, %s981, %s970
        $region68: #{tpu_custom_call.1} parent=35 // pred_fallthru
          _
      $region36: #{tpu_custom_call.1} parent=5 // pred_fallthru
        _
      %p987 = scmp.le.s32.totalorder 2, %s22
      // Predicated region
      $region69: #{tpu_custom_call.1} parent=5 // pred_check
        %p988 = pneg %p987
      $region70: #{tpu_custom_call.1} parent=5 // pred_check_branch
        %990 = sbr.rel (%p988) target = $region72
      $region71: #{tpu_custom_call.1} parent=5 // pred_region
        %s991 = ssub.s32 %s22, 2
        // Predicated region
        $region73: #{tpu_custom_call.1} parent=71 // pred_check
          %p992 = pneg %p169
        $region74: #{tpu_custom_call.1} parent=71 // pred_check_branch
          %994 = sbr.rel (%p992) target = $region76
        $region75: #{tpu_custom_call.1} parent=71 // pred_region
          %s995 = sand.u32 %s154, 1
          %s996 = scalar_lea.sflag [#allocation7], %s995
          %s997 = sand.u32 %s154, 1
          %s998 = smul.addr %s997, 8
          %s999 = scalar_lea.vmem [#allocation13], %s998
          %1000 = dma.done %s996, 128
        $region76: #{tpu_custom_call.1} parent=71 // pred_fallthru
          _
      $region72: #{tpu_custom_call.1} parent=5 // pred_fallthru
        _
    $region6: #{tpu_custom_call.1} parent=1 // loop_footer
      %s26 = sadd.s32 1, %s22
    $region7: #{tpu_custom_call.1} parent=1 // loop_footer_branch
      %21 = sbr.rel target = $region3
    $region8: #{tpu_custom_call.1} parent=1 // loop_exit
      _
    %1001 = vsyncpa [#allocation6], 1
    %s1002 = scalar_lea.sflag [#allocation6], 1
    %1003 = vsyncpa %s1002, 1
    %1004 = vsyncpa [#allocation9], 1
    %s1005 = scalar_lea.sflag [#allocation9], 1
    %1006 = vsyncpa %s1005, 1
    %1007 = vsyncpa [#allocation12], 1
    %s1008 = scalar_lea.sflag [#allocation12], 1
    %1009 = vsyncpa %s1008, 1
    %1010 = vsyncpa [#allocation7], 1
    %s1011 = scalar_lea.sflag [#allocation7], 1
    %1012 = vsyncpa %s1011, 1

</llo_original>
